<compile_context>
chip_gen: v6e
topology: v6e:2x2x1
jax: 0.10.0
libtpu: 0.0.40
codegen_flags: <defaults>
</compile_context>

<pallas_src>
import functools

import jax
import jax.numpy as jnp
from jax.experimental import pallas as pl
from jax.experimental.pallas import tpu as pltpu


def _vec_linear2_kernel(x_ref, w_in_ref, w_x_ref, vout_ref, inv_ref):
    # x_ref   : (tn, 3H)  rows are [v_x | v_y | v_z] in the module's native layout
    # w_in_ref: (3H, 9H)  [blockdiag(W1a.T) | blockdiag(W1b.T) | blockdiag(W2a.T)]
    # w_x_ref : (3H, 3H)  blockdiag(W2b.T)
    # vout_ref: (tn, 3H)  [vout_x | vout_y | vout_z]
    # inv_ref : (tn, H)
    H = inv_ref.shape[-1]

    x = x_ref[...]

    # ONE fused MXU matmul: v1, v2 for all three components plus the v-passthrough
    # half of linear_2, all lane-dense.  (f32 accumulation; default MXU precision
    # matches the XLA reference path.  Pass precision=lax.Precision.HIGHEST here
    # if bit-tighter agreement with a pure-f32 reference is ever required — its
    # cost is fully hidden under DMA.)
    y = jnp.dot(x, w_in_ref[...], preferred_element_type=jnp.float32)

    v1x, v1y, v1z = y[:, 0 * H:1 * H], y[:, 1 * H:2 * H], y[:, 2 * H:3 * H]
    v2x, v2y, v2z = y[:, 3 * H:4 * H], y[:, 4 * H:5 * H], y[:, 5 * H:6 * H]
    vo_v = y[:, 6 * H:9 * H]                           # linear_2 applied to v

    # Cross product over the 3D vector axis (pure VPU, hidden under DMA).
    v3 = jnp.concatenate(
        [v1y * v2z - v1z * v2y,
         v1z * v2x - v1x * v2z,
         v1x * v2y - v1y * v2x],
        axis=-1)                                       # (tn, 3H)

    # Scalar invariant (v1 . v2 over the 3 components).
    inv = v1x * v2x + v1y * v2y + v1z * v2z            # (tn, H)

    # Remaining half of linear_2: v3 @ blockdiag(W2b.T), added to the fused part.
    vo = vo_v + jnp.dot(v3, w_x_ref[...], preferred_element_type=jnp.float32)

    vout_ref[...] = vo.astype(vout_ref.dtype)
    inv_ref[...] = inv.astype(inv_ref.dtype)


def _round_up(x, m):
    return (x + m - 1) // m * m


def _pick_tile(n, tn):
    """Batch tile: multiple of 8, as large as requested but capped so the grid
    has >= 2 steps whenever possible (v7x dual-TensorCore sharding)."""
    n8 = _round_up(n, 8)
    t = max(8, min(_round_up(tn, 8), n8))
    if n8 >= 16:
        t = min(t, _round_up((n8 + 1) // 2, 8))
    return t


@functools.partial(jax.jit, static_argnames=("tn",))
def vec_linear2(v, w1, w2, *, tn=1024):
    """v: (N, 3, H); w1: (2H, H) = linear_1.weight; w2: (H, 2H) = linear_2.weight.

    Returns (v_out (N, 3, H), inv (N, H)), both in v.dtype.
    """
    N, three, H = v.shape
    assert three == 3
    assert w1.shape == (2 * H, H) and w2.shape == (H, 2 * H)

    # Free, layout-preserving view (row-major): (N, 3, H) -> (N, 3H).
    # No transpose, no pad, no extra HBM traffic.
    x = v.reshape(N, 3 * H)

    # Block-diagonal weight prep (tiny, one-time): apply the per-component linear
    # maps directly on the natural (N, 3H) row layout.
    eye3 = jnp.eye(3, dtype=w1.dtype)
    bd = lambda m: jnp.kron(eye3, m)
    w1a_t = w1[:H, :].T        # (H, H): v_c -> v1_c
    w1b_t = w1[H:, :].T        # (H, H): v_c -> v2_c
    w2a_t = w2[:, :H].T        # (H, H): v_c  -> its share of v_out_c (fused in matmul 1)
    w2b_t = w2[:, H:].T        # (H, H): v3_c -> its share of v_out_c
    w_in = jnp.concatenate([bd(w1a_t), bd(w1b_t), bd(w2a_t)], axis=1)   # (3H, 9H)
    w_x = bd(w2b_t)                                                     # (3H, 3H)

    tn_eff = _pick_tile(N, tn)
    grid = pl.cdiv(N, tn_eff)   # ragged last block handled by Pallas edge masking

    vout, inv = pl.pallas_call(
        _vec_linear2_kernel,
        out_shape=(jax.ShapeDtypeStruct((N, 3 * H), v.dtype),
                   jax.ShapeDtypeStruct((N, H), v.dtype)),
        grid_spec=pltpu.PrefetchScalarGridSpec(
            num_scalar_prefetch=0,
            grid=(grid,),
            in_specs=[
                pl.BlockSpec((tn_eff, 3 * H), lambda i: (i, 0)),
                pl.BlockSpec((3 * H, 9 * H), lambda i: (0, 0)),   # resident weights
                pl.BlockSpec((3 * H, 3 * H), lambda i: (0, 0)),   # resident weights
            ],
            out_specs=[
                pl.BlockSpec((tn_eff, 3 * H), lambda i: (i, 0)),
                pl.BlockSpec((tn_eff, H), lambda i: (i, 0)),
            ],
        ),
        compiler_params=pltpu.CompilerParams(
            dimension_semantics=("parallel",)),
    )(x, w_in, w_x)

    # Free reshape back to the module's (N, 3, H) layout; no slicing / copies.
    return vout.reshape(N, 3, H), inv


def _reference(v, w1, w2):
    """Pure-JAX reference mirroring the PyTorch forward exactly."""
    H = v.shape[-1]
    v12 = jnp.einsum("nch,oh->nco", v, w1)          # linear_1, no bias
    v1, v2 = v12[..., :H], v12[..., H:]
    v3 = jnp.cross(v1, v2, axis=1)
    v_cat = jnp.concatenate([v, v3], axis=2)
    v_out = jnp.einsum("nch,oh->nco", v_cat, w2)    # linear_2, no bias
    return v_out, (v1 * v2).sum(axis=1)


if __name__ == "__main__":
    H = 32    # hidden_channels

    key = jax.random.PRNGKey(0)
    kv, k1, k2, kv2 = jax.random.split(key, 4)

    # Deterministic parameter init mimicking nn.Linear (uniform(+-1/sqrt(fan_in))).
    bound1 = 1.0 / (H ** 0.5)
    bound2 = 1.0 / ((2 * H) ** 0.5)
    w1 = jax.random.uniform(k1, (2 * H, H), jnp.float32, -bound1, bound1)   # linear_1.weight
    w2 = jax.random.uniform(k2, (H, 2 * H), jnp.float32, -bound2, bound2)   # linear_2.weight

    # Small batch: tile auto-shrinks to 8 -> 2 exact grid steps.
    N = 16
    v = jax.random.normal(kv, (N, 3, H), dtype=jnp.float32)
    v_out, inv = vec_linear2(v, w1, w2)
    jax.block_until_ready((v_out, inv))
    v_out_ref, inv_ref = _reference(v, w1, w2)
    assert v_out.shape == (N, 3, H) and inv.shape == (N, H)
    assert jnp.allclose(v_out, v_out_ref, atol=1e-4, rtol=1e-4)
    assert jnp.allclose(inv, inv_ref, atol=1e-4, rtol=1e-4)

    # Ragged batch: 3-step grid with a partially-masked last block (no pad copy).
    N2 = 40
    v_b = jax.random.normal(kv2, (N2, 3, H), dtype=jnp.float32)
    v_out_b, inv_b = vec_linear2(v_b, w1, w2, tn=16)
    jax.block_until_ready((v_out_b, inv_b))
    v_out_b_ref, inv_b_ref = _reference(v_b, w1, w2)
    assert v_out_b.shape == (N2, 3, H) and inv_b.shape == (N2, H)
    assert jnp.allclose(v_out_b, v_out_b_ref, atol=1e-4, rtol=1e-4)
    assert jnp.allclose(inv_b, inv_b_ref, atol=1e-4, rtol=1e-4)

    print("KERNEL_OK")
</pallas_src>

<mosaic_0001>
module attributes {stable_mosaic.version = 11 : i64} {
  func.func @_vec_linear2_kernel(%arg0: i32, %arg1: memref<8x96xf32, #tpu.memory_space<vmem>>, %arg2: memref<96x288xf32, #tpu.memory_space<vmem>>, %arg3: memref<96x96xf32, #tpu.memory_space<vmem>>, %arg4: memref<8x96xf32, #tpu.memory_space<vmem>>, %arg5: memref<8x32xf32, #tpu.memory_space<vmem>>) attributes {dimension_semantics = [#tpu.dimension_semantics<parallel>], iteration_bounds = array<i64: 2>, scalar_prefetch = 0 : i64, scratch_operands = 0 : i64, tpu.core_type = #tpu.core_type<tc>, window_params = [{transform_indices = @transform_0, window_bounds = array<i64: 8, 96>}, {pipeline_mode = #tpu.pipeline_mode<synchronous>, transform_indices = @transform_1, window_bounds = array<i64: 96, 288>}, {pipeline_mode = #tpu.pipeline_mode<synchronous>, transform_indices = @transform_2, window_bounds = array<i64: 96, 96>}, {transform_indices = @transform_3, window_bounds = array<i64: 8, 96>}, {transform_indices = @transform_4, window_bounds = array<i64: 8, 32>}]} {
    %c0 = arith.constant 0 : index
    %c0_0 = arith.constant 0 : index
    %0 = vector.load %arg1[%c0, %c0_0] : memref<8x96xf32, #tpu.memory_space<vmem>>, vector<8x96xf32>
    %c0_1 = arith.constant 0 : index
    %c0_2 = arith.constant 0 : index
    %1 = vector.load %arg2[%c0_1, %c0_2] : memref<96x288xf32, #tpu.memory_space<vmem>>, vector<96x288xf32>
    %cst = arith.constant dense<0.000000e+00> : vector<8x288xf32>
    %2 = tpu.matmul %0, %1, %cst {dimension_numbers = #tpu.dot_dimension_numbers<[1], [0], [0], [1], [0, 0, 1, 1], [], []>} : vector<8x96xf32>, vector<96x288xf32>, vector<8x288xf32> -> vector<8x288xf32>
    %3 = vector.extract_strided_slice %2 {offsets = [0, 0], sizes = [8, 32], strides = [1, 1]} : vector<8x288xf32> to vector<8x32xf32>
    %4 = vector.extract_strided_slice %2 {offsets = [0, 32], sizes = [8, 32], strides = [1, 1]} : vector<8x288xf32> to vector<8x32xf32>
    %5 = vector.extract_strided_slice %2 {offsets = [0, 64], sizes = [8, 32], strides = [1, 1]} : vector<8x288xf32> to vector<8x32xf32>
    %6 = vector.extract_strided_slice %2 {offsets = [0, 96], sizes = [8, 32], strides = [1, 1]} : vector<8x288xf32> to vector<8x32xf32>
    %7 = vector.extract_strided_slice %2 {offsets = [0, 128], sizes = [8, 32], strides = [1, 1]} : vector<8x288xf32> to vector<8x32xf32>
    %8 = vector.extract_strided_slice %2 {offsets = [0, 160], sizes = [8, 32], strides = [1, 1]} : vector<8x288xf32> to vector<8x32xf32>
    %9 = vector.extract_strided_slice %2 {offsets = [0, 192], sizes = [8, 96], strides = [1, 1]} : vector<8x288xf32> to vector<8x96xf32>
    %10 = arith.mulf %4, %8 : vector<8x32xf32>
    %11 = arith.mulf %5, %7 : vector<8x32xf32>
    %12 = arith.subf %10, %11 : vector<8x32xf32>
    %13 = arith.mulf %5, %6 : vector<8x32xf32>
    %14 = arith.mulf %3, %8 : vector<8x32xf32>
    %15 = arith.subf %13, %14 : vector<8x32xf32>
    %16 = arith.mulf %3, %7 : vector<8x32xf32>
    %17 = arith.mulf %4, %6 : vector<8x32xf32>
    %18 = arith.subf %16, %17 : vector<8x32xf32>
    %19 = tpu.concatenate %12, %15, %18 in 1 : vector<8x32xf32>, vector<8x32xf32>, vector<8x32xf32> -> vector<8x96xf32>
    %20 = arith.mulf %3, %6 : vector<8x32xf32>
    %21 = arith.mulf %4, %7 : vector<8x32xf32>
    %22 = arith.addf %20, %21 : vector<8x32xf32>
    %23 = arith.mulf %5, %8 : vector<8x32xf32>
    %24 = arith.addf %22, %23 : vector<8x32xf32>
    %c0_3 = arith.constant 0 : index
    %c0_4 = arith.constant 0 : index
    %25 = vector.load %arg3[%c0_3, %c0_4] : memref<96x96xf32, #tpu.memory_space<vmem>>, vector<96x96xf32>
    %cst_5 = arith.constant dense<0.000000e+00> : vector<8x96xf32>
    %26 = tpu.matmul %19, %25, %cst_5 {dimension_numbers = #tpu.dot_dimension_numbers<[1], [0], [0], [1], [0, 0, 1, 1], [], []>} : vector<8x96xf32>, vector<96x96xf32>, vector<8x96xf32> -> vector<8x96xf32>
    %27 = arith.addf %9, %26 : vector<8x96xf32>
    %c0_6 = arith.constant 0 : index
    %c0_7 = arith.constant 0 : index
    %28 = vector.load %arg4[%c0_6, %c0_7] : memref<8x96xf32, #tpu.memory_space<vmem>>, vector<8x96xf32>
    tpu.vector_store %arg4[%c0_6, %c0_7], %27 {strides = array<i32>} : memref<8x96xf32, #tpu.memory_space<vmem>>, vector<8x96xf32>,
    %c0_8 = arith.constant 0 : index
    %c0_9 = arith.constant 0 : index
    %29 = vector.load %arg5[%c0_8, %c0_9] : memref<8x32xf32, #tpu.memory_space<vmem>>, vector<8x32xf32>
    tpu.vector_store %arg5[%c0_8, %c0_9], %24 {strides = array<i32>} : memref<8x32xf32, #tpu.memory_space<vmem>>, vector<8x32xf32>,
    return
  }
  func.func @transform_0(%arg0: i32) -> (i32, i32) {
    %c0_i32 = arith.constant 0 : i32
    %c0_i32_0 = arith.constant 0 : i32
    return %arg0, %c0_i32 : i32, i32
  }
  func.func @transform_1(%arg0: i32) -> (i32, i32) {
    %c0_i32 = arith.constant 0 : i32
    %c0_i32_0 = arith.constant 0 : i32
    %c0_i32_1 = arith.constant 0 : i32
    return %c0_i32, %c0_i32_0 : i32, i32
  }
  func.func @transform_2(%arg0: i32) -> (i32, i32) {
    %c0_i32 = arith.constant 0 : i32
    %c0_i32_0 = arith.constant 0 : i32
    %c0_i32_1 = arith.constant 0 : i32
    return %c0_i32, %c0_i32_0 : i32, i32
  }
  func.func @transform_3(%arg0: i32) -> (i32, i32) {
    %c0_i32 = arith.constant 0 : i32
    %c0_i32_0 = arith.constant 0 : i32
    return %arg0, %c0_i32 : i32, i32
  }
  func.func @transform_4(%arg0: i32) -> (i32, i32) {
    %c0_i32 = arith.constant 0 : i32
    %c0_i32_0 = arith.constant 0 : i32
    return %arg0, %c0_i32 : i32, i32
  }
}

</mosaic_0001>

<llo_original>
// kernel: vec_linear2.1
$region0: #{vec_linear2.1}
  #allocation0 [shape = 'u32[]', space=smem, size = 0x4, offset = 0x4, fixed_abs, tag = 'smem constant byte address 0x4 - core index']
  #allocation1 [shape = 'u32[144,128]{1,0:T(1,128)}', space=vmem, size = 0x12000, scoped, tag = 'internal scratch']
  %s0 = inlined_call_operand.vmem [shape: f32[16,96], index: 0, kind: input, shape index: {}]
  %s1 = inlined_call_operand.vmem [shape: f32[96,288], index: 1, kind: input, shape index: {}]
  %s2 = inlined_call_operand.vmem [shape: f32[96,96], index: 2, kind: input, shape index: {}]
  %s3 = inlined_call_operand.vmem [shape: f32[16,96], index: 3, kind: output, shape index: {0}]
  %s4 = inlined_call_operand.hbm [shape: f32[16,32], index: 4, kind: output, shape index: {1}]
  %5 = xla_tuple %s3, %s4
  %s6 = sld [smem:[#allocation0]]
  $region53: #{vec_linear2.1} parent=0
    _
  %s8 = ssub.s32 1, %s6
  %s9 = scalar_select 0, %s8, %s6
  $region1: #{vec_linear2.1} parent=0
    #allocation2 [shape = 'u8[8192]{0}', space=vmem, size = 0x2000, scoped, tag = 'output window, operand 1']
    #allocation3 [shape = 's32[2]{0}', space=sflag, size = 0x8, scoped, tag = 'scoped memory for vec_linear2.1']
    %10 = vsyncpa [#allocation3], 0
    %s11 = scalar_lea.sflag [#allocation3], 1
    %12 = vsyncpa %s11, 0
    loop: start=0, step=1, limit=4
    $region2: #{vec_linear2.1} parent=1 // loop_pre_header
      _
    $region3: #{vec_linear2.1} parent=1 // loop_header
      %s14 = sphi 0, %s18
      %p15 = scmp.ge.s32.totalorder %s14, 4
      %s24 = sphi 0, %s26
      %s27 = sphi 0, %s24
      %s28 = sphi 0, %s27
      %s44 = sphi 0, %s28
      %s48 = sphi 0, %s48
      %s50 = sphi 0, %s48
      %s51 = sphi 0, %s50
      %s65 = sphi 0, %s51
      %s69 = sphi 0, %s69
      %s71 = sphi 0, %s69
      %s72 = sphi 0, %s71
      %s86 = sphi 0, %s72
      %s92 = sphi 0, %s94
      %s95 = sphi 0, %s92
      %s96 = sphi 0, %s95
      %s112 = sphi 0, %s96
      %s118 = sphi 0, %s120
      %s121 = sphi 0, %s118
      %s122 = sphi 0, %s121
      %s138 = sphi 0, %s122
    $region4: #{vec_linear2.1} parent=1 // loop_header_branch
      %17 = sbr.rel (%p15) target = $region8
    $region5: #{vec_linear2.1} parent=1 // loop_body
      %s19 = ssub.s32 %s14, 1
      %s20 = ssub.s32 %s14, 2
      %s21 = sadd.s32 %s14, 1
      %s22 = ssub.s32 %s14, %s21
      %p23 = scmp.eq.s32.totalorder %s22, 0
      %s25 = sadd.s32 %s24, 1
      %s26 = scalar_select %p23, %s24, %s25
      %p29 = pneg %p23
      %p30 = scmp.eq.s32.totalorder %s14, 1
      %p31 = por %p29, %p30
      %p32 = scmp.ne.s32.totalorder %s24, %s27
      %p33 = scmp.eq.s32.totalorder %s14, 0
      %p34 = por %p32, %p33
      %p35 = scmp.ne.s32.totalorder %s24, %s27
      %p36 = scmp.eq.s32.totalorder %s19, 1
      %p37 = por %p35, %p36
      %p38 = scmp.ne.s32.totalorder %s27, %s28
      %p39 = scmp.eq.s32.totalorder %s19, 0
      %p40 = por %p38, %p39
      %p41 = scmp.ne.s32.totalorder %s27, %s28
      %p42 = scmp.eq.s32.totalorder %s20, 1
      %p43 = por %p41, %p42
      %p45 = scmp.ne.s32.totalorder %s28, %s44
      %p46 = scmp.eq.s32.totalorder %s20, 0
      %p47 = por %p45, %p46
      %s49 = sadd.s32 %s48, 1
      %p52 = scmp.eq.s32.totalorder %s14, 1
      %p53 = scmp.ne.s32.totalorder %s48, %s50
      %p54 = scmp.eq.s32.totalorder %s14, 0
      %p55 = por %p53, %p54
      %p56 = scmp.ne.s32.totalorder %s48, %s50
      %p57 = scmp.eq.s32.totalorder %s19, 1
      %p58 = por %p56, %p57
      %p59 = scmp.ne.s32.totalorder %s50, %s51
      %p60 = scmp.eq.s32.totalorder %s19, 0
      %p61 = por %p59, %p60
      %p62 = scmp.ne.s32.totalorder %s50, %s51
      %p63 = scmp.eq.s32.totalorder %s20, 1
      %p64 = por %p62, %p63
      %p66 = scmp.ne.s32.totalorder %s51, %s65
      %p67 = scmp.eq.s32.totalorder %s20, 0
      %p68 = por %p66, %p67
      %s70 = sadd.s32 %s69, 1
      %p73 = scmp.eq.s32.totalorder %s14, 1
      %p74 = scmp.ne.s32.totalorder %s69, %s71
      %p75 = scmp.eq.s32.totalorder %s14, 0
      %p76 = por %p74, %p75
      %p77 = scmp.ne.s32.totalorder %s69, %s71
      %p78 = scmp.eq.s32.totalorder %s19, 1
      %p79 = por %p77, %p78
      %p80 = scmp.ne.s32.totalorder %s71, %s72
      %p81 = scmp.eq.s32.totalorder %s19, 0
      %p82 = por %p80, %p81
      %p83 = scmp.ne.s32.totalorder %s71, %s72
      %p84 = scmp.eq.s32.totalorder %s20, 1
      %p85 = por %p83, %p84
      %p87 = scmp.ne.s32.totalorder %s72, %s86
      %p88 = scmp.eq.s32.totalorder %s20, 0
      %p89 = por %p87, %p88
      %s90 = ssub.s32 %s14, %s21
      %p91 = scmp.eq.s32.totalorder %s90, 0
      %s93 = sadd.s32 %s92, 1
      %s94 = scalar_select %p91, %s92, %s93
      %p97 = pneg %p91
      %p98 = scmp.eq.s32.totalorder %s14, 1
      %p99 = por %p97, %p98
      %p100 = scmp.ne.s32.totalorder %s92, %s95
      %p101 = scmp.eq.s32.totalorder %s14, 0
      %p102 = por %p100, %p101
      %p103 = scmp.ne.s32.totalorder %s92, %s95
      %p104 = scmp.eq.s32.totalorder %s19, 1
      %p105 = por %p103, %p104
      %p106 = scmp.ne.s32.totalorder %s95, %s96
      %p107 = scmp.eq.s32.totalorder %s19, 0
      %p108 = por %p106, %p107
      %p109 = scmp.ne.s32.totalorder %s95, %s96
      %p110 = scmp.eq.s32.totalorder %s20, 1
      %p111 = por %p109, %p110
      %p113 = scmp.ne.s32.totalorder %s96, %s112
      %p114 = scmp.eq.s32.totalorder %s20, 0
      %p115 = por %p113, %p114
      %s116 = ssub.s32 %s14, %s21
      %p117 = scmp.eq.s32.totalorder %s116, 0
      %s119 = sadd.s32 %s118, 1
      %s120 = scalar_select %p117, %s118, %s119
      %p123 = pneg %p117
      %p124 = scmp.eq.s32.totalorder %s14, 1
      %p125 = por %p123, %p124
      %p126 = scmp.ne.s32.totalorder %s118, %s121
      %p127 = scmp.eq.s32.totalorder %s14, 0
      %p128 = por %p126, %p127
      %p129 = scmp.ne.s32.totalorder %s118, %s121
      %p130 = scmp.eq.s32.totalorder %s19, 1
      %p131 = por %p129, %p130
      %p132 = scmp.ne.s32.totalorder %s121, %s122
      %p133 = scmp.eq.s32.totalorder %s19, 0
      %p134 = por %p132, %p133
      %p135 = scmp.ne.s32.totalorder %s121, %s122
      %p136 = scmp.eq.s32.totalorder %s20, 1
      %p137 = por %p135, %p136
      %p139 = scmp.ne.s32.totalorder %s122, %s138
      %p140 = scmp.eq.s32.totalorder %s20, 0
      %p141 = por %p139, %p140
      %p142 = scmp.le.s32.totalorder 1, %s14
      %p143 = scmp.lt.s32.totalorder %s14, 3
      %p144 = pnand %p142, %p143
      %p145 = pneg %p144
      // Predicated region
      $region9: #{vec_linear2.1} parent=5 // pred_check
        _
      $region10: #{vec_linear2.1} parent=5 // pred_check_branch
        %147 = sbr.rel (%p144) target = $region12
      $region11: #{vec_linear2.1} parent=5 // pred_region
        %s148 = ssub.s32 %s14, 1
        // Predicated region
        $region13: #{vec_linear2.1} parent=11 // pred_check
          %p149 = pneg %p61
        $region14: #{vec_linear2.1} parent=11 // pred_check_branch
          %151 = sbr.rel (%p149) target = $region16
        $region15: #{vec_linear2.1} parent=11 // pred_region
          _
        $region16: #{vec_linear2.1} parent=11 // pred_fallthru
          _
        // Predicated region
        $region17: #{vec_linear2.1} parent=11 // pred_check
          %p152 = pneg %p82
        $region18: #{vec_linear2.1} parent=11 // pred_check_branch
          %154 = sbr.rel (%p152) target = $region20
        $region19: #{vec_linear2.1} parent=11 // pred_region
          _
        $region20: #{vec_linear2.1} parent=11 // pred_fallthru
          _
      $region12: #{vec_linear2.1} parent=5 // pred_fallthru
        _
      %p155 = scmp.lt.s32.totalorder %s14, 2
      // Predicated region
      $region21: #{vec_linear2.1} parent=5 // pred_check
        %p156 = pneg %p155
      $region22: #{vec_linear2.1} parent=5 // pred_check_branch
        %158 = sbr.rel (%p156) target = $region24
      $region23: #{vec_linear2.1} parent=5 // pred_region
        // Predicated region
        $region25: #{vec_linear2.1} parent=23 // pred_check
          %p159 = pneg %p34
        $region26: #{vec_linear2.1} parent=23 // pred_check_branch
          %161 = sbr.rel (%p159) target = $region28
        $region27: #{vec_linear2.1} parent=23 // pred_region
          %p162 = scmp.lt.s32.totalorder %s14, 1
          %s163 = scalar_select %p162, %s14, 1
          %s164 = smul.addr %s163, 8
          %s165 = scalar_lea.vmem %s0, %s164
        $region28: #{vec_linear2.1} parent=23 // pred_fallthru
          _
      $region24: #{vec_linear2.1} parent=5 // pred_fallthru
        _
      %p166 = scmp.le.s32.totalorder 1, %s14
      %p167 = scmp.lt.s32.totalorder %s14, 3
      %p168 = pnand %p166, %p167
      %p169 = pneg %p168
      // Predicated region
      $region29: #{vec_linear2.1} parent=5 // pred_check
        _
      $region30: #{vec_linear2.1} parent=5 // pred_check_branch
        %171 = sbr.rel (%p168) target = $region32
      $region31: #{vec_linear2.1} parent=5 // pred_region
        %s172 = ssub.s32 %s14, 1
        %p173 = scmp.lt.s32.totalorder %s19, 1
        %s174 = scalar_select %p173, %s19, 1
        %s175 = smul.addr %s174, 8
        %s176 = scalar_lea.vmem %s0, %s175
        %p177 = pneg %p40
        %p178 = pneg %p37
        %p179 = pneg %p61
        %p180 = pneg %p58
        %p181 = pneg %p82
        %p182 = pneg %p79
        %p183 = pneg %p108
        %p184 = pneg %p105
        %p185 = scmp.lt.s32.totalorder %s19, 1
        %s186 = scalar_select %p185, %s19, 1
        %s187 = smul.addr %s186, 8
        %s188 = scalar_lea.vmem %s3, %s187
        %p189 = pneg %p134
        %p190 = pneg %p131
        %s191 = sand.u32 %s121, 1
        %s192 = scalar_lea.sflag [#allocation3], %s191
        %s193 = sand.u32 %s121, 1
        %s194 = smul.addr %s193, 8
        %s195 = scalar_lea.vmem [#allocation2], %s194
        %p196 = scmp.lt.s32.totalorder %s19, 1
        %s197 = scalar_select %p196, %s19, 1
        %s198 = smul.addr %s197, 8
        %s199 = scalar_lea.vmem %s0, %s198
        %p200 = scmp.lt.s32.totalorder %s19, 1
        %s201 = scalar_select %p200, %s19, 1
        %s202 = smul.addr %s201, 8
        %s203 = scalar_lea.vmem %s3, %s202
        %v204 = vld [vmem:[%s199] sm:$0xff]
        %v205 = vld [vmem:[%s1] sm:$0xff]
        %v206 = vld [vmem:[%s1 + $0x8] sm:$0xff]
        %v207 = vld [vmem:[%s1 + $0x10] sm:$0xff]
        %v208 = vld [vmem:[%s1 + $0x18] sm:$0xff]
        %v209 = vld [vmem:[%s1 + $0x20] sm:$0xff]
        %v210 = vld [vmem:[%s1 + $0x28] sm:$0xff]
        %v211 = vld [vmem:[%s1 + $0x30] sm:$0xff]
        %v212 = vld [vmem:[%s1 + $0x38] sm:$0xff]
        %v213 = vld [vmem:[%s1 + $0x40] sm:$0xff]
        %v214 = vld [vmem:[%s1 + $0x48] sm:$0xff]
        %v215 = vld [vmem:[%s1 + $0x50] sm:$0xff]
        %v216 = vld [vmem:[%s1 + $0x58] sm:$0xff]
        %v217 = vld [vmem:[%s1 + $0x60] sm:$0xff]
        %v218 = vld [vmem:[%s1 + $0x68] sm:$0xff]
        %v219 = vld [vmem:[%s1 + $0x70] sm:$0xff]
        %v220 = vld [vmem:[%s1 + $0x78] sm:$0xff]
        %v221 = vld [vmem:[%s1 + $0x80] sm:$0xff]
        %v222 = vld [vmem:[%s1 + $0x88] sm:$0xff]
        %v223 = vld [vmem:[%s1 + $0x90] sm:$0xff]
        %v224 = vld [vmem:[%s1 + $0x98] sm:$0xff]
        %v225 = vld [vmem:[%s1 + $0xa0] sm:$0xff]
        %v226 = vld [vmem:[%s1 + $0xa8] sm:$0xff]
        %v227 = vld [vmem:[%s1 + $0xb0] sm:$0xff]
        %v228 = vld [vmem:[%s1 + $0xb8] sm:$0xff]
        %v229 = vld [vmem:[%s1 + $0xc0] sm:$0xff]
        %v230 = vld [vmem:[%s1 + $0xc8] sm:$0xff]
        %v231 = vld [vmem:[%s1 + $0xd0] sm:$0xff]
        %v232 = vld [vmem:[%s1 + $0xd8] sm:$0xff]
        %v233 = vld [vmem:[%s1 + $0xe0] sm:$0xff]
        %v234 = vld [vmem:[%s1 + $0xe8] sm:$0xff]
        %v235 = vld [vmem:[%s1 + $0xf0] sm:$0xff]
        %v236 = vld [vmem:[%s1 + $0xf8] sm:$0xff]
        %v237 = vld [vmem:[%s1 + $0x100] sm:$0xff]
        %v238 = vld [vmem:[%s1 + $0x108] sm:$0xff]
        %v239 = vld [vmem:[%s1 + $0x110] sm:$0xff]
        %v240 = vld [vmem:[%s1 + $0x118] sm:$0xff]
        %vm241 = vcmask 785408
        %v243 = vsel %vm241, %v204, 0
        %245 = vmatprep.subr.mxu0 0.0
        %246 = vmatpush1.msra.mxu0 0.0
        %247 = vmatprep.subr.mxu0 0.0
        %248 = vmatpush1.msra.mxu0 0.0
        %249 = vmatprep.subr.mxu0 0.0
        %250 = vmatpush1.msra.mxu0 0.0
        %251 = vmatprep.subr.mxu0 0.0
        %252 = vmatpush1.msra.mxu0 0.0
        %253 = vmatprep.subr.mxu0 %v239
        %254 = vmatpush1.msra.mxu0 %v238
        %255 = vmatprep.subr.mxu0 %v236
        %256 = vmatpush1.msra.mxu0 %v235
        %257 = vmatprep.subr.mxu0 %v233
        %258 = vmatpush1.msra.mxu0 %v232
        %259 = vmatprep.subr.mxu0 %v230
        %260 = vmatpush1.msra.mxu0 %v229
        %261 = vmatprep.subr.mxu0 %v227
        %262 = vmatpush1.msra.mxu0 %v226
        %263 = vmatprep.subr.mxu0 %v224
        %264 = vmatpush1.msra.mxu0 %v223
        %265 = vmatprep.subr.mxu0 %v221
        %266 = vmatpush1.msra.mxu0 %v220
        %267 = vmatprep.subr.mxu0 %v218
        %268 = vmatpush1.msra.mxu0 %v217
        %269 = vmatprep.subr.mxu0 %v215
        %270 = vmatpush1.msra.mxu0 %v214
        %271 = vmatprep.subr.mxu0 %v212
        %272 = vmatpush1.msra.mxu0 %v211
        %273 = vmatprep.subr.mxu0 %v209
        %274 = vmatpush1.msra.mxu0 %v208
        %275 = vmatprep.subr.mxu0 %v206
        %276 = vmatpush1.msra.mxu0 %v205
        %277 = vmatprep.subr.mxu0 0.0
        %278 = vmatpush2.msra.mxu0 0.0
        %279 = vmatprep.subr.mxu0 0.0
        %280 = vmatpush2.msra.mxu0 0.0
        %281 = vmatprep.subr.mxu0 0.0
        %282 = vmatpush2.msra.mxu0 0.0
        %283 = vmatprep.subr.mxu0 0.0
        %284 = vmatpush2.msra.mxu0 0.0
        %285 = vmatprep.subr.mxu0 0.0
        %286 = vmatpush2.msra.mxu0 0.0
        %287 = vmatprep.subr.mxu0 0.0
        %288 = vmatpush2.msra.mxu0 0.0
        %289 = vmatprep.subr.mxu0 0.0
        %290 = vmatpush2.msra.mxu0 0.0
        %291 = vmatprep.subr.mxu0 0.0
        %292 = vmatpush2.msra.mxu0 0.0
        %293 = vmatprep.subr.mxu0 0.0
        %294 = vmatpush2.msra.mxu0 0.0
        %295 = vmatprep.subr.mxu0 0.0
        %296 = vmatpush2.msra.mxu0 0.0
        %297 = vmatprep.subr.mxu0 0.0
        %298 = vmatpush2.msra.mxu0 0.0
        %299 = vmatprep.subr.mxu0 0.0
        %300 = vmatpush2.msra.mxu0 0.0
        %301 = vmatprep.subr.mxu0 0.0
        %302 = vmatpush2.msra.mxu0 0.0
        %303 = vmatprep.subr.mxu0 0.0
        %304 = vmatpush2.msra.mxu0 0.0
        %305 = vmatprep.subr.mxu0 0.0
        %306 = vmatpush2.msra.mxu0 0.0
        %307 = vmatprep.subr.mxu0 0.0
        %308 = vmatpush2.msra.mxu0 0.0
        %309 = vmatprep.mubr.f32.mxu0 0.0
        %310 = vmatmul.mubr.f32.gmra.mxu0 %v243
        %v311 = vpop.f32.mrf.mxu0
        %v312 = vadd.f32 0.0, %v311
        %v313 = vpop.f32.mrf.mxu0
        %v314 = vadd.f32 0.0, %v313
        %315 = vdwg.mxu0
        %316 = vmatprep.subr.mxu0 0.0
        %317 = vmatpush1.msra.mxu0 0.0
        %318 = vmatprep.subr.mxu0 0.0
        %319 = vmatpush1.msra.mxu0 0.0
        %320 = vmatprep.subr.mxu0 0.0
        %321 = vmatpush1.msra.mxu0 0.0
        %322 = vmatprep.subr.mxu0 0.0
        %323 = vmatpush1.msra.mxu0 0.0
        %324 = vmatprep.subr.mxu0 0.0
        %325 = vmatpush1.msra.mxu0 %v240
        %326 = vmatprep.subr.mxu0 0.0
        %327 = vmatpush1.msra.mxu0 %v237
        %328 = vmatprep.subr.mxu0 0.0
        %329 = vmatpush1.msra.mxu0 %v234
        %330 = vmatprep.subr.mxu0 0.0
        %331 = vmatpush1.msra.mxu0 %v231
        %332 = vmatprep.subr.mxu0 0.0
        %333 = vmatpush1.msra.mxu0 %v228
        %334 = vmatprep.subr.mxu0 0.0
        %335 = vmatpush1.msra.mxu0 %v225
        %336 = vmatprep.subr.mxu0 0.0
        %337 = vmatpush1.msra.mxu0 %v222
        %338 = vmatprep.subr.mxu0 0.0
        %339 = vmatpush1.msra.mxu0 %v219
        %340 = vmatprep.subr.mxu0 0.0
        %341 = vmatpush1.msra.mxu0 %v216
        %342 = vmatprep.subr.mxu0 0.0
        %343 = vmatpush1.msra.mxu0 %v213
        %344 = vmatprep.subr.mxu0 0.0
        %345 = vmatpush1.msra.mxu0 %v210
        %346 = vmatprep.subr.mxu0 0.0
        %347 = vmatpush1.msra.mxu0 %v207
        %348 = vmatprep.subr.mxu0 0.0
        %349 = vmatpush2.msra.mxu0 0.0
        %350 = vmatprep.subr.mxu0 0.0
        %351 = vmatpush2.msra.mxu0 0.0
        %352 = vmatprep.subr.mxu0 0.0
        %353 = vmatpush2.msra.mxu0 0.0
        %354 = vmatprep.subr.mxu0 0.0
        %355 = vmatpush2.msra.mxu0 0.0
        %356 = vmatprep.subr.mxu0 0.0
        %357 = vmatpush2.msra.mxu0 0.0
        %358 = vmatprep.subr.mxu0 0.0
        %359 = vmatpush2.msra.mxu0 0.0
        %360 = vmatprep.subr.mxu0 0.0
        %361 = vmatpush2.msra.mxu0 0.0
        %362 = vmatprep.subr.mxu0 0.0
        %363 = vmatpush2.msra.mxu0 0.0
        %364 = vmatprep.subr.mxu0 0.0
        %365 = vmatpush2.msra.mxu0 0.0
        %366 = vmatprep.subr.mxu0 0.0
        %367 = vmatpush2.msra.mxu0 0.0
        %368 = vmatprep.subr.mxu0 0.0
        %369 = vmatpush2.msra.mxu0 0.0
        %370 = vmatprep.subr.mxu0 0.0
        %371 = vmatpush2.msra.mxu0 0.0
        %372 = vmatprep.subr.mxu0 0.0
        %373 = vmatpush2.msra.mxu0 0.0
        %374 = vmatprep.subr.mxu0 0.0
        %375 = vmatpush2.msra.mxu0 0.0
        %376 = vmatprep.subr.mxu0 0.0
        %377 = vmatpush2.msra.mxu0 0.0
        %378 = vmatprep.subr.mxu0 0.0
        %379 = vmatpush2.msra.mxu0 0.0
        %380 = vmatprep.mubr.f32.mxu0 0.0
        %381 = vmatmul.mubr.f32.gmra.mxu0 %v243
        %v382 = vpop.f32.mrf.mxu0
        %v383 = vadd.f32 0.0, %v382
        %v384 = vpop.f32.mrf.mxu0
        %385 = vdwg.mxu0
        %v386 = vmul.f32 %v312, %v314
        %388 = vrot.lane.b32.xlu0 %v314, 64
        %v389 = vpop.permute.xlu0 %388
        %v391 = vmul.f32 %v312, %v389
        %393 = vrot.lane.b32.xlu0 %v391, 96
        %v394 = vpop.permute.xlu0 %393
        %v396 = vsub.f32 %v386, %v394
        %398 = vrot.lane.b32.xlu0 %v312, 96
        %v399 = vpop.permute.xlu0 %398
        %v401 = vmul.f32 %v312, %v399
        %402 = vrot.lane.b32.xlu0 %v314, 96
        %v403 = vpop.permute.xlu0 %402
        %v405 = vmul.f32 %v312, %v403
        %407 = vrot.lane.b32.xlu0 %v405, 64
        %v408 = vpop.permute.xlu0 %407
        %v410 = vsub.f32 %v401, %v408
        %411 = vrot.lane.b32.xlu0 %v312, 64
        %v412 = vpop.permute.xlu0 %411
        %v414 = vmul.f32 %v312, %v412
        %416 = vrot.lane.b32.xlu0 %v414, 96
        %v417 = vpop.permute.xlu0 %416
        %v419 = vsub.f32 %v386, %v417
        %421 = vrot.lane.b32.xlu0 %v396, 96
        %v422 = vpop.permute.xlu0 %421
        %425 = vrot.lane.b32.xlu0 %v410, 96
        %v426 = vpop.permute.xlu0 %425
        %429 = vrot.lane.b32.xlu0 %v419, 64
        %v430 = vpop.permute.xlu0 %429
        %vm432 = vcmask 261120
        %v433 = vsel %vm432, %v422, %v426
        %vm434 = vcmask 523264
        %v435 = vsel %vm434, %v433, %v430
        %436 = vrot.lane.b32.xlu0 %v312, 32
        %v437 = vpop.permute.xlu0 %436
        %v439 = vmul.f32 %v312, %v437
        %440 = vrot.lane.b32.xlu0 %v314, 32
        %v441 = vpop.permute.xlu0 %440
        %v443 = vmul.f32 %v312, %v441
        %445 = vrot.lane.b32.xlu0 %v443, 96
        %v446 = vpop.permute.xlu0 %445
        %v448 = vadd.f32 %v439, %v446
        %449 = vrot.lane.b32.xlu0 %v443, 64
        %v450 = vpop.permute.xlu0 %449
        %v452 = vadd.f32 %v448, %v450
        %v453 = vld [vmem:[%s2] sm:$0xff]
        %v454 = vld [vmem:[%s2 + $0x8] sm:$0xff]
        %v455 = vld [vmem:[%s2 + $0x10] sm:$0xff]
        %v456 = vld [vmem:[%s2 + $0x18] sm:$0xff]
        %v457 = vld [vmem:[%s2 + $0x20] sm:$0xff]
        %v458 = vld [vmem:[%s2 + $0x28] sm:$0xff]
        %v459 = vld [vmem:[%s2 + $0x30] sm:$0xff]
        %v460 = vld [vmem:[%s2 + $0x38] sm:$0xff]
        %v461 = vld [vmem:[%s2 + $0x40] sm:$0xff]
        %v462 = vld [vmem:[%s2 + $0x48] sm:$0xff]
        %v463 = vld [vmem:[%s2 + $0x50] sm:$0xff]
        %v464 = vld [vmem:[%s2 + $0x58] sm:$0xff]
        %v466 = vsel %vm241, %v435, 0
        %468 = vmatprep.subr.mxu0 0.0
        %469 = vmatpush1.msra.mxu0 0.0
        %470 = vmatprep.subr.mxu0 0.0
        %471 = vmatpush1.msra.mxu0 0.0
        %472 = vmatprep.subr.mxu0 0.0
        %473 = vmatpush1.msra.mxu0 0.0
        %474 = vmatprep.subr.mxu0 0.0
        %475 = vmatpush1.msra.mxu0 0.0
        %476 = vmatprep.subr.mxu0 0.0
        %477 = vmatpush1.msra.mxu0 %v464
        %478 = vmatprep.subr.mxu0 0.0
        %479 = vmatpush1.msra.mxu0 %v463
        %480 = vmatprep.subr.mxu0 0.0
        %481 = vmatpush1.msra.mxu0 %v462
        %482 = vmatprep.subr.mxu0 0.0
        %483 = vmatpush1.msra.mxu0 %v461
        %484 = vmatprep.subr.mxu0 0.0
        %485 = vmatpush1.msra.mxu0 %v460
        %486 = vmatprep.subr.mxu0 0.0
        %487 = vmatpush1.msra.mxu0 %v459
        %488 = vmatprep.subr.mxu0 0.0
        %489 = vmatpush1.msra.mxu0 %v458
        %490 = vmatprep.subr.mxu0 0.0
        %491 = vmatpush1.msra.mxu0 %v457
        %492 = vmatprep.subr.mxu0 0.0
        %493 = vmatpush1.msra.mxu0 %v456
        %494 = vmatprep.subr.mxu0 0.0
        %495 = vmatpush1.msra.mxu0 %v455
        %496 = vmatprep.subr.mxu0 0.0
        %497 = vmatpush1.msra.mxu0 %v454
        %498 = vmatprep.subr.mxu0 0.0
        %499 = vmatpush1.msra.mxu0 %v453
        %500 = vmatprep.subr.mxu0 0.0
        %501 = vmatpush2.msra.mxu0 0.0
        %502 = vmatprep.subr.mxu0 0.0
        %503 = vmatpush2.msra.mxu0 0.0
        %504 = vmatprep.subr.mxu0 0.0
        %505 = vmatpush2.msra.mxu0 0.0
        %506 = vmatprep.subr.mxu0 0.0
        %507 = vmatpush2.msra.mxu0 0.0
        %508 = vmatprep.subr.mxu0 0.0
        %509 = vmatpush2.msra.mxu0 0.0
        %510 = vmatprep.subr.mxu0 0.0
        %511 = vmatpush2.msra.mxu0 0.0
        %512 = vmatprep.subr.mxu0 0.0
        %513 = vmatpush2.msra.mxu0 0.0
        %514 = vmatprep.subr.mxu0 0.0
        %515 = vmatpush2.msra.mxu0 0.0
        %516 = vmatprep.subr.mxu0 0.0
        %517 = vmatpush2.msra.mxu0 0.0
        %518 = vmatprep.subr.mxu0 0.0
        %519 = vmatpush2.msra.mxu0 0.0
        %520 = vmatprep.subr.mxu0 0.0
        %521 = vmatpush2.msra.mxu0 0.0
        %522 = vmatprep.subr.mxu0 0.0
        %523 = vmatpush2.msra.mxu0 0.0
        %524 = vmatprep.subr.mxu0 0.0
        %525 = vmatpush2.msra.mxu0 0.0
        %526 = vmatprep.subr.mxu0 0.0
        %527 = vmatpush2.msra.mxu0 0.0
        %528 = vmatprep.subr.mxu0 0.0
        %529 = vmatpush2.msra.mxu0 0.0
        %530 = vmatprep.subr.mxu0 0.0
        %531 = vmatpush2.msra.mxu0 0.0
        %532 = vmatprep.mubr.f32.mxu0 0.0
        %533 = vmatmul.mubr.f32.gmra.mxu0 %v466
        %v534 = vpop.f32.mrf.mxu0
        %v535 = vadd.f32 0.0, %v534
        %v536 = vpop.f32.mrf.mxu0
        %537 = vdwg.mxu0
        %539 = vrot.lane.b32.xlu0 %v535, 64
        %v540 = vpop.permute.xlu0 %539
        %v542 = vadd.f32 %v314, %v540
        %v543 = vadd.f32 %v383, %v540
        %546 = vrot.lane.b32.xlu0 %v542, 64
        %v547 = vpop.permute.xlu0 %546
        %548 = vrot.lane.b32.xlu0 %v543, 64
        %v549 = vpop.permute.xlu0 %548
        %v550 = vsel %vm434, %v547, %v549
        %552 = vst.msk [vmem:[%s203] sm:$0xff] %vm241, %v550
        %553 = vst.msk [vmem:[%s195] sm:$0xff] %vm432, %v452
        %p554 = scmp.lt.s32.totalorder %s19, 1
        %s555 = scalar_select %p554, %s19, 1
        %s556 = smul.addr %s555, 8
        %s557 = scalar_lea.vmem %s3, %s556
        %s558 = sand.u32 %s121, 1
        %s559 = scalar_lea.sflag [#allocation3], %s558
        %s560 = sand.u32 %s121, 1
        %s561 = smul.addr %s560, 8
        %s562 = scalar_lea.vmem [#allocation2], %s561
        // Predicated region
        $region33: #{vec_linear2.1} parent=31 // pred_check
          %p563 = pneg %p105
        $region34: #{vec_linear2.1} parent=31 // pred_check_branch
          %565 = sbr.rel (%p563) target = $region36
        $region35: #{vec_linear2.1} parent=31 // pred_region
          _
        $region36: #{vec_linear2.1} parent=31 // pred_fallthru
          _
        // Predicated region
        $region37: #{vec_linear2.1} parent=31 // pred_check
          %p566 = pneg %p131
        $region38: #{vec_linear2.1} parent=31 // pred_check_branch
          %568 = sbr.rel (%p566) target = $region40
        $region39: #{vec_linear2.1} parent=31 // pred_region
          %s570 = ssub.s32 128, 128
          %571 = vsyncadd %s559, %s570
          %s572 = smul.addr %s19, 128
          %s573 = scalar_lea.hbm %s4, %s572
          %s575 = sshll.u32 %s562, 4
          %s576 = int_to_ptr.vmem [resolvable:$true] %s575
          %578 = dma.vmem_to_hbm [thread:$0]  %s576, 128, %s573, %s559
        $region40: #{vec_linear2.1} parent=31 // pred_fallthru
          _
      $region32: #{vec_linear2.1} parent=5 // pred_fallthru
        _
      %p579 = scmp.le.s32.totalorder 2, %s14
      // Predicated region
      $region41: #{vec_linear2.1} parent=5 // pred_check
        %p580 = pneg %p579
      $region42: #{vec_linear2.1} parent=5 // pred_check_branch
        %582 = sbr.rel (%p580) target = $region44
      $region43: #{vec_linear2.1} parent=5 // pred_region
        %s583 = ssub.s32 %s14, 2
        // Predicated region
        $region45: #{vec_linear2.1} parent=43 // pred_check
          %p584 = pneg %p111
        $region46: #{vec_linear2.1} parent=43 // pred_check_branch
          %586 = sbr.rel (%p584) target = $region48
        $region47: #{vec_linear2.1} parent=43 // pred_region
          %p587 = scmp.lt.s32.totalorder %s20, 1
          %s588 = scalar_select %p587, %s20, 1
          %s589 = smul.addr %s588, 8
          %s590 = scalar_lea.vmem %s3, %s589
        $region48: #{vec_linear2.1} parent=43 // pred_fallthru
          _
        // Predicated region
        $region49: #{vec_linear2.1} parent=43 // pred_check
          %p591 = pneg %p137
        $region50: #{vec_linear2.1} parent=43 // pred_check_branch
          %593 = sbr.rel (%p591) target = $region52
        $region51: #{vec_linear2.1} parent=43 // pred_region
          %s594 = sand.u32 %s122, 1
          %s595 = scalar_lea.sflag [#allocation3], %s594
          %s596 = sand.u32 %s122, 1
          %s597 = smul.addr %s596, 8
          %s598 = scalar_lea.vmem [#allocation2], %s597
          %599 = dma.done %s595, 128
        $region52: #{vec_linear2.1} parent=43 // pred_fallthru
          _
      $region44: #{vec_linear2.1} parent=5 // pred_fallthru
        _
    $region6: #{vec_linear2.1} parent=1 // loop_footer
      %s18 = sadd.s32 1, %s14
    $region7: #{vec_linear2.1} parent=1 // loop_footer_branch
      %13 = sbr.rel target = $region3
    $region8: #{vec_linear2.1} parent=1 // loop_exit
      _
    %600 = vsyncpa [#allocation3], 1
    %s601 = scalar_lea.sflag [#allocation3], 1
    %602 = vsyncpa %s601, 1

</llo_original>
